<compile_context>
chip_gen: v7x
topology: tpu7x:2x2x1
jax: 0.10.0
libtpu: 0.0.40
codegen_flags: <defaults>
</compile_context>

<pallas_src>
import functools

import jax
import jax.numpy as jnp
from jax.experimental import pallas as pl
from jax.experimental.pallas import tpu as pltpu


def _round_up(n, m):
    return (n + m - 1) // m * m


def _vmem_capacity_bytes():
    """Physical VMEM per core; conservative v7x-sized fallback if the query fails."""
    try:
        return int(pltpu.get_tpu_info().vmem_capacity_bytes)
    except Exception:
        return 64 << 20


def _pick_batch_tile(B, vmem_cap, weight_bytes):
    """Sublane-aligned batch tile that bounds padding waste (B_pad - B)."""
    if B <= 512:
        return _round_up(max(B, 1), 8)
    candidates = [512, 384, 256]
    # v5e/v6e (128 MiB VMEM): allow a 1024-row tile when the weights are small.
    if vmem_cap >= (100 << 20) and weight_bytes <= (8 << 20) and B >= 1024:
        candidates = [1024] + candidates
    # Minimize padded rows; break ties toward the larger tile (fewer grid steps).
    return min(candidates, key=lambda t: (_round_up(B, t) - B, -t))


def _ffnn_kernel(x_ref, w1_ref, b1_ref, w2_ref, b2_ref, out_ref):
    # x:  [TB, Dp] f32     w1: [Dp, Hp] bf16   b1: [1, Hp] f32
    # w2: [Hp, Op] bf16    b2: [1, Op]  f32    out: [TB, Op] bf16
    # Cast the activation to bf16 in-kernel (VPU), keep accumulation in f32.
    x = x_ref[...].astype(w1_ref.dtype)

    # Hidden layer: ReLU(x @ W1 + b1)
    h = jnp.dot(x, w1_ref[...], preferred_element_type=jnp.float32) + b1_ref[...]
    h = jnp.maximum(h, 0.0)

    # Output layer: h @ W2 + b2. b2's padded lanes hold -1e30 (W2 padded columns are
    # exact zeros), so the padded logits are already masked for the log-softmax.
    z = jnp.dot(h.astype(w2_ref.dtype), w2_ref[...],
                preferred_element_type=jnp.float32) + b2_ref[...]

    # Numerically stable LogSoftmax over the last axis (f32).
    m = jnp.max(z, axis=-1, keepdims=True)
    shifted = z - m
    lse = jnp.log(jnp.sum(jnp.exp(shifted), axis=-1, keepdims=True))
    out_ref[...] = (shifted - lse).astype(out_ref.dtype)


@functools.partial(jax.jit, static_argnames=("single_buffer_weights",))
def _ffnn_forward_impl(x, w1, b1, w2, b2, single_buffer_weights=True):
    B, D = x.shape
    H = w1.shape[1]
    O = w2.shape[1]

    # Lane-aligned padded dims (all padding is exact zero-padding except b2, see below).
    D_pad = _round_up(D, 128)
    H_pad = _round_up(H, 128)
    O_pad = _round_up(O, 128)

    weight_bytes = (D_pad * H_pad + H_pad * O_pad) * 2 + (H_pad + O_pad) * 4
    vmem_cap = _vmem_capacity_bytes()

    TB = _pick_batch_tile(B, vmem_cap, weight_bytes)
    B_pad = _round_up(B, TB)
    grid = (B_pad // TB,)

    # Activations stay f32 here (cast to bf16 inside the kernel). Pad only if the
    # shapes are not already tile-aligned (the common real case needs no extra pass).
    if B_pad != B or D_pad != D:
        x_in = jnp.pad(x, ((0, B_pad - B), (0, D_pad - D)))
    else:
        x_in = x
    x_in = x_in.astype(jnp.float32)

    # Weights are small: pad + cast to bf16 wrapper-side. Biases stay f32.
    w1_p = jnp.pad(w1, ((0, D_pad - D), (0, H_pad - H))).astype(jnp.bfloat16)
    b1_p = jnp.pad(b1, (0, H_pad - H)).astype(jnp.float32).reshape(1, H_pad)
    w2_p = jnp.pad(w2, ((0, H_pad - H), (0, O_pad - O))).astype(jnp.bfloat16)
    # Pre-mask the padded output lanes through the bias (large negative, kept finite
    # so no 0 * inf hazards downstream). The padded region is sliced off below.
    b2_p = jnp.pad(b2.astype(jnp.float32), (0, O_pad - O),
                   constant_values=-1e30).reshape(1, O_pad)

    # VMEM budget: resident weights (single- or double-buffered), double-buffered
    # x/out tiles, plus the kernel's implicit temporaries (x-bf16, h f32, h-bf16, z),
    # with margin for Mosaic internal scratch. Capped at ~80% of physical VMEM.
    weight_bufs = 1 if single_buffer_weights else 2
    x_tile = TB * D_pad * 4        # f32 input tile
    out_tile = TB * O_pad * 2      # bf16 output tile
    temps = TB * D_pad * 2 + TB * H_pad * 4 + TB * H_pad * 2 + TB * O_pad * 4
    need = weight_bufs * weight_bytes + 2 * (x_tile + out_tile) + temps + (4 << 20)
    vmem_bytes = int(min(max(need, 32 << 20), int(vmem_cap * 0.8)))

    cost = pl.CostEstimate(
        flops=2 * B_pad * (D_pad * H_pad + H_pad * O_pad),
        transcendentals=B_pad * (O_pad + 1),
        bytes_accessed=(x_in.size * 4 + w1_p.size * 2 + w2_p.size * 2
                        + b1_p.size * 4 + b2_p.size * 4 + B_pad * O_pad * 2),
    )

    # Resident (constant index_map) operands: request single buffering if allowed.
    w_kwargs = {"pipeline_mode": pl.Buffered(1)} if single_buffer_weights else {}
    in_specs = [
        pl.BlockSpec((TB, D_pad), lambda i: (i, 0)),                  # x: batch-tiled
        pl.BlockSpec((D_pad, H_pad), lambda i: (0, 0), **w_kwargs),   # W1: resident
        pl.BlockSpec((1, H_pad), lambda i: (0, 0), **w_kwargs),       # b1: resident
        pl.BlockSpec((H_pad, O_pad), lambda i: (0, 0), **w_kwargs),   # W2: resident
        pl.BlockSpec((1, O_pad), lambda i: (0, 0), **w_kwargs),       # b2: resident
    ]

    out_padded = pl.pallas_call(
        _ffnn_kernel,
        out_shape=jax.ShapeDtypeStruct((B_pad, O_pad), jnp.bfloat16),  # lane-dense bf16
        grid=grid,
        in_specs=in_specs,
        out_specs=pl.BlockSpec((TB, O_pad), lambda i: (i, 0)),
        compiler_params=pltpu.CompilerParams(
            dimension_semantics=("parallel",),
            vmem_limit_bytes=vmem_bytes,
        ),
        cost_estimate=cost,
    )(x_in, w1_p, b1_p, w2_p, b2_p)

    # Padded rows/lanes must never be consumed: slice first, then upcast.
    return out_padded[:B, :O].astype(jnp.float32)


_SINGLE_BUFFER_WEIGHTS = True


def ffnn_forward(x, w1, b1, w2, b2):
    """x: [B, D] f32; w1: [D, H]; b1: [H]; w2: [H, O]; b2: [O] -> [B, O] f32 log-probs."""
    global _SINGLE_BUFFER_WEIGHTS
    if _SINGLE_BUFFER_WEIGHTS:
        try:
            return _ffnn_forward_impl(x, w1, b1, w2, b2, single_buffer_weights=True)
        except Exception:
            # If this Pallas build rejects pl.Buffered(1) for resident operands, fall
            # back once to the default double-buffered pipeline (identical results).
            _SINGLE_BUFFER_WEIGHTS = False
    return _ffnn_forward_impl(x, w1, b1, w2, b2, single_buffer_weights=False)


def init_params(key, input_dim, hidden_dim, output_dim=5):
    """Deterministic init mimicking nn.Linear's U(-1/sqrt(fan_in), 1/sqrt(fan_in))."""
    k1, k2, k3, k4 = jax.random.split(key, 4)
    bound1 = 1.0 / jnp.sqrt(input_dim)
    bound2 = 1.0 / jnp.sqrt(hidden_dim)
    # Stored pre-transposed relative to PyTorch: [in_features, out_features].
    w1 = jax.random.uniform(k1, (input_dim, hidden_dim), jnp.float32, -bound1, bound1)
    b1 = jax.random.uniform(k2, (hidden_dim,), jnp.float32, -bound1, bound1)
    w2 = jax.random.uniform(k3, (hidden_dim, output_dim), jnp.float32, -bound2, bound2)
    b2 = jax.random.uniform(k4, (output_dim,), jnp.float32, -bound2, bound2)
    return w1, b1, w2, b2


def ffnn_reference(x, w1, b1, w2, b2):
    h = jnp.maximum(x @ w1 + b1, 0.0)
    z = h @ w2 + b2
    return jax.nn.log_softmax(z, axis=-1)


if __name__ == "__main__":
    key = jax.random.PRNGKey(0)
    k_x, k_p = jax.random.split(key)

    batch, input_dim, hidden = 8, 32, 32
    x = jax.random.normal(k_x, (batch, input_dim), jnp.float32)
    w1, b1, w2, b2 = init_params(k_p, input_dim, hidden, output_dim=5)

    out = jax.block_until_ready(ffnn_forward(x, w1, b1, w2, b2))

    ref = ffnn_reference(x, w1, b1, w2, b2)
    assert out.shape == (batch, 5)
    assert bool(jnp.all(jnp.isfinite(out))), "non-finite log-probs"
    # bf16 MXU inputs + bf16 output store (f32 accumulate / softmax) vs f32 reference.
    assert jnp.allclose(out, ref, atol=3e-2, rtol=3e-2), "mismatch vs JAX reference"

    print("KERNEL_OK")
</pallas_src>

<mosaic_0001>
module attributes {stable_mosaic.version = 11 : i64} {
  func.func @_ffnn_kernel(%arg0: i32, %arg1: memref<8x128xf32, #tpu.memory_space<vmem>>, %arg2: memref<128x128xbf16, #tpu.memory_space<vmem>>, %arg3: memref<1x128xf32, #tpu.memory_space<vmem>>, %arg4: memref<128x128xbf16, #tpu.memory_space<vmem>>, %arg5: memref<1x128xf32, #tpu.memory_space<vmem>>, %arg6: memref<8x128xbf16, #tpu.memory_space<vmem>>) attributes {dimension_semantics = [#tpu.dimension_semantics<parallel>], iteration_bounds = array<i64: 1>, scalar_prefetch = 0 : i64, scratch_operands = 0 : i64, tpu.core_type = #tpu.core_type<tc>, window_params = [{transform_indices = @transform_0, window_bounds = array<i64: 8, 128>}, {pipeline_mode = #tpu.pipeline_mode<synchronous>, transform_indices = @transform_1, window_bounds = array<i64: 128, 128>}, {pipeline_mode = #tpu.pipeline_mode<synchronous>, transform_indices = @transform_2, window_bounds = array<i64: 1, 128>}, {pipeline_mode = #tpu.pipeline_mode<synchronous>, transform_indices = @transform_3, window_bounds = array<i64: 128, 128>}, {pipeline_mode = #tpu.pipeline_mode<synchronous>, transform_indices = @transform_4, window_bounds = array<i64: 1, 128>}, {transform_indices = @transform_5, window_bounds = array<i64: 8, 128>}]} {
    %c0 = arith.constant 0 : index
    %c0_0 = arith.constant 0 : index
    %0 = vector.load %arg1[%c0, %c0_0] : memref<8x128xf32, #tpu.memory_space<vmem>>, vector<8x128xf32>
    %1 = arith.truncf %0 : vector<8x128xf32> to vector<8x128xbf16>
    %c0_1 = arith.constant 0 : index
    %c0_2 = arith.constant 0 : index
    %2 = vector.load %arg2[%c0_1, %c0_2] : memref<128x128xbf16, #tpu.memory_space<vmem>>, vector<128x128xbf16>
    %cst = arith.constant dense<0.000000e+00> : vector<8x128xf32>
    %3 = tpu.matmul %1, %2, %cst {dimension_numbers = #tpu.dot_dimension_numbers<[1], [0], [0], [1], [0, 0, 1, 1], [], []>} : vector<8x128xbf16>, vector<128x128xbf16>, vector<8x128xf32> -> vector<8x128xf32>
    %c0_3 = arith.constant 0 : index
    %c0_4 = arith.constant 0 : index
    %4 = vector.load %arg3[%c0_3, %c0_4] : memref<1x128xf32, #tpu.memory_space<vmem>>, vector<1x128xf32>
    %5 = vector.broadcast %4 : vector<1x128xf32> to vector<8x128xf32>
    %6 = arith.addf %3, %5 : vector<8x128xf32>
    %cst_5 = arith.constant 0.000000e+00 : f32
    %7 = vector.broadcast %cst_5 : f32 to vector<8x128xf32>
    %8 = arith.maximumf %6, %7 : vector<8x128xf32>
    %9 = arith.truncf %8 : vector<8x128xf32> to vector<8x128xbf16>
    %c0_6 = arith.constant 0 : index
    %c0_7 = arith.constant 0 : index
    %10 = vector.load %arg4[%c0_6, %c0_7] : memref<128x128xbf16, #tpu.memory_space<vmem>>, vector<128x128xbf16>
    %cst_8 = arith.constant dense<0.000000e+00> : vector<8x128xf32>
    %11 = tpu.matmul %9, %10, %cst_8 {dimension_numbers = #tpu.dot_dimension_numbers<[1], [0], [0], [1], [0, 0, 1, 1], [], []>} : vector<8x128xbf16>, vector<128x128xbf16>, vector<8x128xf32> -> vector<8x128xf32>
    %c0_9 = arith.constant 0 : index
    %c0_10 = arith.constant 0 : index
    %12 = vector.load %arg5[%c0_9, %c0_10] : memref<1x128xf32, #tpu.memory_space<vmem>>, vector<1x128xf32>
    %13 = vector.broadcast %12 : vector<1x128xf32> to vector<8x128xf32>
    %14 = arith.addf %11, %13 : vector<8x128xf32>
    %cst_11 = arith.constant dense<0xFF800000> : vector<8xf32>
    %15 = vector.multi_reduction <maximumf>, %14, %cst_11 [1] : vector<8x128xf32> to vector<8xf32>
    %16 = vector.shape_cast %15 : vector<8xf32> to vector<8x1xf32>
    %17 = vector.broadcast %16 : vector<8x1xf32> to vector<8x128xf32>
    %18 = arith.subf %14, %17 : vector<8x128xf32>
    %19 = math.exp %18 : vector<8x128xf32>
    %cst_12 = arith.constant dense<0.000000e+00> : vector<8xf32>
    %20 = vector.multi_reduction <add>, %19, %cst_12 [1] : vector<8x128xf32> to vector<8xf32>
    %21 = vector.shape_cast %20 : vector<8xf32> to vector<8x1xf32>
    %22 = math.log %21 : vector<8x1xf32>
    %23 = vector.broadcast %22 : vector<8x1xf32> to vector<8x128xf32>
    %24 = arith.subf %18, %23 : vector<8x128xf32>
    %25 = arith.truncf %24 : vector<8x128xf32> to vector<8x128xbf16>
    %c0_13 = arith.constant 0 : index
    %c0_14 = arith.constant 0 : index
    %26 = vector.load %arg6[%c0_13, %c0_14] : memref<8x128xbf16, #tpu.memory_space<vmem>>, vector<8x128xbf16>
    tpu.vector_store %arg6[%c0_13, %c0_14], %25 {strides = array<i32>} : memref<8x128xbf16, #tpu.memory_space<vmem>>, vector<8x128xbf16>,
    return
  }
  func.func @transform_0(%arg0: i32) -> (i32, i32) {
    %c0_i32 = arith.constant 0 : i32
    %c0_i32_0 = arith.constant 0 : i32
    return %arg0, %c0_i32 : i32, i32
  }
  func.func @transform_1(%arg0: i32) -> (i32, i32) {
    %c0_i32 = arith.constant 0 : i32
    %c0_i32_0 = arith.constant 0 : i32
    %c0_i32_1 = arith.constant 0 : i32
    return %c0_i32, %c0_i32_0 : i32, i32
  }
  func.func @transform_2(%arg0: i32) -> (i32, i32) {
    %c0_i32 = arith.constant 0 : i32
    %c0_i32_0 = arith.constant 0 : i32
    %c0_i32_1 = arith.constant 0 : i32
    return %c0_i32, %c0_i32_0 : i32, i32
  }
  func.func @transform_3(%arg0: i32) -> (i32, i32) {
    %c0_i32 = arith.constant 0 : i32
    %c0_i32_0 = arith.constant 0 : i32
    %c0_i32_1 = arith.constant 0 : i32
    return %c0_i32, %c0_i32_0 : i32, i32
  }
  func.func @transform_4(%arg0: i32) -> (i32, i32) {
    %c0_i32 = arith.constant 0 : i32
    %c0_i32_0 = arith.constant 0 : i32
    %c0_i32_1 = arith.constant 0 : i32
    return %c0_i32, %c0_i32_0 : i32, i32
  }
  func.func @transform_5(%arg0: i32) -> (i32, i32) {
    %c0_i32 = arith.constant 0 : i32
    %c0_i32_0 = arith.constant 0 : i32
    return %arg0, %c0_i32 : i32, i32
  }
}

module attributes {stable_mosaic.version = 11 : i64} {
  func.func @_ffnn_kernel(%arg0: i32, %arg1: memref<8x128xf32, #tpu.memory_space<vmem>>, %arg2: memref<128x128xbf16, #tpu.memory_space<vmem>>, %arg3: memref<1x128xf32, #tpu.memory_space<vmem>>, %arg4: memref<128x128xbf16, #tpu.memory_space<vmem>>, %arg5: memref<1x128xf32, #tpu.memory_space<vmem>>, %arg6: memref<8x128xbf16, #tpu.memory_space<vmem>>) attributes {dimension_semantics = [#tpu.dimension_semantics<parallel>], iteration_bounds = array<i64: 1>, scalar_prefetch = 0 : i64, scratch_operands = 0 : i64, tpu.core_type = #tpu.core_type<tc>, window_params = [{transform_indices = @transform_0, window_bounds = array<i64: 8, 128>}, {pipeline_mode = #tpu.pipeline_mode<synchronous>, transform_indices = @transform_1, window_bounds = array<i64: 128, 128>}, {pipeline_mode = #tpu.pipeline_mode<synchronous>, transform_indices = @transform_2, window_bounds = array<i64: 1, 128>}, {pipeline_mode = #tpu.pipeline_mode<synchronous>, transform_indices = @transform_3, window_bounds = array<i64: 128, 128>}, {pipeline_mode = #tpu.pipeline_mode<synchronous>, transform_indices = @transform_4, window_bounds = array<i64: 1, 128>}, {transform_indices = @transform_5, window_bounds = array<i64: 8, 128>}]} {
    %c0 = arith.constant 0 : index
    %c0_0 = arith.constant 0 : index
    %0 = vector.load %arg1[%c0, %c0_0] : memref<8x128xf32, #tpu.memory_space<vmem>>, vector<8x128xf32>
    %1 = arith.truncf %0 : vector<8x128xf32> to vector<8x128xbf16>
    %c0_1 = arith.constant 0 : index
    %c0_2 = arith.constant 0 : index
    %2 = vector.load %arg2[%c0_1, %c0_2] : memref<128x128xbf16, #tpu.memory_space<vmem>>, vector<128x128xbf16>
    %cst = arith.constant dense<0.000000e+00> : vector<8x128xf32>
    %3 = tpu.matmul %1, %2, %cst {dimension_numbers = #tpu.dot_dimension_numbers<[1], [0], [0], [1], [0, 0, 1, 1], [], []>} : vector<8x128xbf16>, vector<128x128xbf16>, vector<8x128xf32> -> vector<8x128xf32>
    %c0_3 = arith.constant 0 : index
    %c0_4 = arith.constant 0 : index
    %4 = vector.load %arg3[%c0_3, %c0_4] : memref<1x128xf32, #tpu.memory_space<vmem>>, vector<1x128xf32>
    %5 = vector.broadcast %4 : vector<1x128xf32> to vector<8x128xf32>
    %6 = arith.addf %3, %5 : vector<8x128xf32>
    %cst_5 = arith.constant 0.000000e+00 : f32
    %7 = vector.broadcast %cst_5 : f32 to vector<8x128xf32>
    %8 = arith.maximumf %6, %7 : vector<8x128xf32>
    %9 = arith.truncf %8 : vector<8x128xf32> to vector<8x128xbf16>
    %c0_6 = arith.constant 0 : index
    %c0_7 = arith.constant 0 : index
    %10 = vector.load %arg4[%c0_6, %c0_7] : memref<128x128xbf16, #tpu.memory_space<vmem>>, vector<128x128xbf16>
    %cst_8 = arith.constant dense<0.000000e+00> : vector<8x128xf32>
    %11 = tpu.matmul %9, %10, %cst_8 {dimension_numbers = #tpu.dot_dimension_numbers<[1], [0], [0], [1], [0, 0, 1, 1], [], []>} : vector<8x128xbf16>, vector<128x128xbf16>, vector<8x128xf32> -> vector<8x128xf32>
    %c0_9 = arith.constant 0 : index
    %c0_10 = arith.constant 0 : index
    %12 = vector.load %arg5[%c0_9, %c0_10] : memref<1x128xf32, #tpu.memory_space<vmem>>, vector<1x128xf32>
    %13 = vector.broadcast %12 : vector<1x128xf32> to vector<8x128xf32>
    %14 = arith.addf %11, %13 : vector<8x128xf32>
    %cst_11 = arith.constant dense<0xFF800000> : vector<8xf32>
    %15 = vector.multi_reduction <maximumf>, %14, %cst_11 [1] : vector<8x128xf32> to vector<8xf32>
    %16 = vector.shape_cast %15 : vector<8xf32> to vector<8x1xf32>
    %17 = vector.broadcast %16 : vector<8x1xf32> to vector<8x128xf32>
    %18 = arith.subf %14, %17 : vector<8x128xf32>
    %19 = math.exp %18 : vector<8x128xf32>
    %cst_12 = arith.constant dense<0.000000e+00> : vector<8xf32>
    %20 = vector.multi_reduction <add>, %19, %cst_12 [1] : vector<8x128xf32> to vector<8xf32>
    %21 = vector.shape_cast %20 : vector<8xf32> to vector<8x1xf32>
    %22 = math.log %21 : vector<8x1xf32>
    %23 = vector.broadcast %22 : vector<8x1xf32> to vector<8x128xf32>
    %24 = arith.subf %18, %23 : vector<8x128xf32>
    %25 = arith.truncf %24 : vector<8x128xf32> to vector<8x128xbf16>
    %c0_13 = arith.constant 0 : index
    %c0_14 = arith.constant 0 : index
    %26 = vector.load %arg6[%c0_13, %c0_14] : memref<8x128xbf16, #tpu.memory_space<vmem>>, vector<8x128xbf16>
    tpu.vector_store %arg6[%c0_13, %c0_14], %25 {strides = array<i32>} : memref<8x128xbf16, #tpu.memory_space<vmem>>, vector<8x128xbf16>,
    return
  }
  func.func @transform_0(%arg0: i32) -> (i32, i32) {
    %c0_i32 = arith.constant 0 : i32
    %c0_i32_0 = arith.constant 0 : i32
    return %arg0, %c0_i32 : i32, i32
  }
  func.func @transform_1(%arg0: i32) -> (i32, i32) {
    %c0_i32 = arith.constant 0 : i32
    %c0_i32_0 = arith.constant 0 : i32
    %c0_i32_1 = arith.constant 0 : i32
    return %c0_i32, %c0_i32_0 : i32, i32
  }
  func.func @transform_2(%arg0: i32) -> (i32, i32) {
    %c0_i32 = arith.constant 0 : i32
    %c0_i32_0 = arith.constant 0 : i32
    %c0_i32_1 = arith.constant 0 : i32
    return %c0_i32, %c0_i32_0 : i32, i32
  }
  func.func @transform_3(%arg0: i32) -> (i32, i32) {
    %c0_i32 = arith.constant 0 : i32
    %c0_i32_0 = arith.constant 0 : i32
    %c0_i32_1 = arith.constant 0 : i32
    return %c0_i32, %c0_i32_0 : i32, i32
  }
  func.func @transform_4(%arg0: i32) -> (i32, i32) {
    %c0_i32 = arith.constant 0 : i32
    %c0_i32_0 = arith.constant 0 : i32
    %c0_i32_1 = arith.constant 0 : i32
    return %c0_i32, %c0_i32_0 : i32, i32
  }
  func.func @transform_5(%arg0: i32) -> (i32, i32) {
    %c0_i32 = arith.constant 0 : i32
    %c0_i32_0 = arith.constant 0 : i32
    return %arg0, %c0_i32 : i32, i32
  }
}

</mosaic_0001>

<llo_original>
// kernel: _ffnn_forward_impl.1
$region0: #{_ffnn_forward_impl.1}
  #allocation0 [shape = 'u32[]', space=smem, size = 0x4, offset = 0x4, fixed_abs, tag = 'smem constant byte address 0x4 - core index']
  #allocation1 [shape = 'u32[144,128]{1,0:T(1,128)}', space=vmem, size = 0x12000, scoped, tag = 'internal scratch']
  %s0 = inlined_call_operand.vmem [shape: f32[8,128], index: 0, kind: input, shape index: {}]
  %s1 = inlined_call_operand.vmem [shape: bf16[128,128], index: 1, kind: input, shape index: {}]
  %s2 = inlined_call_operand.vmem [shape: f32[1,128], index: 2, kind: input, shape index: {}]
  %s3 = inlined_call_operand.vmem [shape: bf16[128,128], index: 3, kind: input, shape index: {}]
  %s4 = inlined_call_operand.vmem [shape: f32[1,128], index: 4, kind: input, shape index: {}]
  %s5 = inlined_call_operand.vmem [shape: bf16[8,128], index: 5, kind: output, shape index: {}]
  %s6 = sld [smem:[#allocation0]]
  $region30: #{_ffnn_forward_impl.1} parent=0
    _
  %s8 = ssub.s32 1, %s6
  %s9 = scalar_select 0, %s8, %s6
  // Predicated region
  $region2: #{_ffnn_forward_impl.1} parent=0 // pred_check
    _
  $region3: #{_ffnn_forward_impl.1} parent=0 // pred_check_branch
    %11 = sbr.rel (0) target = $region5
  $region4: #{_ffnn_forward_impl.1} parent=0 // pred_region
    _
  $region5: #{_ffnn_forward_impl.1} parent=0 // pred_fallthru
    _
  // Predicated region
  $region6: #{_ffnn_forward_impl.1} parent=0 // pred_check
    _
  $region7: #{_ffnn_forward_impl.1} parent=0 // pred_check_branch
    %13 = sbr.rel (0) target = $region9
  $region8: #{_ffnn_forward_impl.1} parent=0 // pred_region
    _
  $region9: #{_ffnn_forward_impl.1} parent=0 // pred_fallthru
    _
  // Predicated region
  $region10: #{_ffnn_forward_impl.1} parent=0 // pred_check
    _
  $region11: #{_ffnn_forward_impl.1} parent=0 // pred_check_branch
    %15 = sbr.rel (0) target = $region13
  $region12: #{_ffnn_forward_impl.1} parent=0 // pred_region
    _
  $region13: #{_ffnn_forward_impl.1} parent=0 // pred_fallthru
    _
  // Predicated region
  $region14: #{_ffnn_forward_impl.1} parent=0 // pred_check
    _
  $region15: #{_ffnn_forward_impl.1} parent=0 // pred_check_branch
    %17 = sbr.rel (0) target = $region17
  $region16: #{_ffnn_forward_impl.1} parent=0 // pred_region
    _
  $region17: #{_ffnn_forward_impl.1} parent=0 // pred_fallthru
    _
  // Predicated region
  $region18: #{_ffnn_forward_impl.1} parent=0 // pred_check
    _
  $region19: #{_ffnn_forward_impl.1} parent=0 // pred_check_branch
    %19 = sbr.rel (0) target = $region21
  $region20: #{_ffnn_forward_impl.1} parent=0 // pred_region
    _
  $region21: #{_ffnn_forward_impl.1} parent=0 // pred_fallthru
    _
  %v21 = vld [vmem:[%s0] sm:$0xff]
  %v22 = vpack.c.bf16 %v21, %v21
  %v23 = vld [vmem:[%s1] sm:$0xf]
  %v24 = vld [vmem:[%s1 + $0x4] sm:$0xf]
  %v25 = vld [vmem:[%s1 + $0x8] sm:$0xf]
  %v26 = vld [vmem:[%s1 + $0xc] sm:$0xf]
  %v27 = vld [vmem:[%s1 + $0x10] sm:$0xf]
  %v28 = vld [vmem:[%s1 + $0x14] sm:$0xf]
  %v29 = vld [vmem:[%s1 + $0x18] sm:$0xf]
  %v30 = vld [vmem:[%s1 + $0x1c] sm:$0xf]
  %v31 = vld [vmem:[%s1 + $0x20] sm:$0xf]
  %v32 = vld [vmem:[%s1 + $0x24] sm:$0xf]
  %v33 = vld [vmem:[%s1 + $0x28] sm:$0xf]
  %v34 = vld [vmem:[%s1 + $0x2c] sm:$0xf]
  %v35 = vld [vmem:[%s1 + $0x30] sm:$0xf]
  %v36 = vld [vmem:[%s1 + $0x34] sm:$0xf]
  %v37 = vld [vmem:[%s1 + $0x38] sm:$0xf]
  %v38 = vld [vmem:[%s1 + $0x3c] sm:$0xf]
  %v39 = vld [vmem:[%s2] sm:$0x1]
  %v41 = vlaneseq
  %v42 = vshrl.u32 %v41, 7
  %v43 = vsub.s32 0, %v42
  %v44 = vrot.slane %v39, %v43
  %v62 = vunpack.c.l.b16 %v23
  %v63 = vunpack.c.l.b16 %v24
  %v64 = vunpack.c.l.b16 %v25
  %v65 = vunpack.c.l.b16 %v26
  %v66 = vunpack.c.l.b16 %v27
  %v67 = vunpack.c.l.b16 %v28
  %v68 = vunpack.c.l.b16 %v29
  %v69 = vunpack.c.l.b16 %v30
  %v70 = vunpack.c.l.b16 %v31
  %v71 = vunpack.c.l.b16 %v32
  %v72 = vunpack.c.l.b16 %v33
  %v73 = vunpack.c.l.b16 %v34
  %v74 = vunpack.c.l.b16 %v35
  %v75 = vunpack.c.l.b16 %v36
  %v76 = vunpack.c.l.b16 %v37
  %v77 = vunpack.c.l.b16 %v38
  %v78 = vpack.c.b16 %v63, %v62
  %v79 = vpack.c.b16 %v65, %v64
  %v80 = vpack.c.b16 %v67, %v66
  %v81 = vpack.c.b16 %v69, %v68
  %v82 = vpack.c.b16 %v71, %v70
  %v83 = vpack.c.b16 %v73, %v72
  %v84 = vpack.c.b16 %v75, %v74
  %v85 = vpack.c.b16 %v77, %v76
  %94 = vmatprep.subr.bf16.mxu0 0
  %95 = vmatpush1.bf16.msra.mxu0 %v78
  %96 = vmatprep.subr.bf16.mxu0 0
  %97 = vmatpush1.bf16.msra.mxu0 %v79
  %98 = vmatprep.subr.bf16.mxu0 0
  %99 = vmatpush1.bf16.msra.mxu0 %v80
  %100 = vmatprep.subr.bf16.mxu0 0
  %101 = vmatpush1.bf16.msra.mxu0 %v81
  %102 = vmatprep.subr.bf16.mxu0 0
  %103 = vmatpush1.bf16.msra.mxu0 %v82
  %104 = vmatprep.subr.bf16.mxu0 0
  %105 = vmatpush1.bf16.msra.mxu0 %v83
  %106 = vmatprep.subr.bf16.mxu0 0
  %107 = vmatpush1.bf16.msra.mxu0 %v84
  %108 = vmatprep.subr.bf16.mxu0 0
  %109 = vmatpush1.bf16.msra.mxu0 %v85
  %110 = vmatprep.subr.bf16.mxu0 0
  %111 = vmatpush1.bf16.msra.mxu0 0
  %112 = vmatprep.subr.bf16.mxu0 0
  %113 = vmatpush1.bf16.msra.mxu0 0
  %114 = vmatprep.subr.bf16.mxu0 0
  %115 = vmatpush1.bf16.msra.mxu0 0
  %116 = vmatprep.subr.bf16.mxu0 0
  %117 = vmatpush1.bf16.msra.mxu0 0
  %118 = vmatprep.subr.bf16.mxu0 0
  %119 = vmatpush1.bf16.msra.mxu0 0
  %120 = vmatprep.subr.bf16.mxu0 0
  %121 = vmatpush1.bf16.msra.mxu0 0
  %122 = vmatprep.subr.bf16.mxu0 0
  %123 = vmatpush1.bf16.msra.mxu0 0
  %124 = vmatprep.subr.bf16.mxu0 0
  %125 = vmatpush1.bf16.msra.mxu0 0
  %126 = vmatprep.mubr.bf16.mxu0 0
  %127 = vmatmul.mubr.bf16.gmra.mrb[0].mxu0 %v22
  %v128 = vpop.f32.mrb[0].mxu0
  %v129 = vadd.f32 %v44, %v128
  %v130 = vpop.f32.mrb[0].mxu0
  %v131 = vpop.f32.mrb[0].mxu0
  %v132 = vpop.f32.mrb[0].mxu0
  %133 = vdwg.mxu0
  %v134 = vmax.f32 %v129, 0.0
  %v135 = vpack.c.bf16 %v134, %v134
  %v136 = vld [vmem:[%s3] sm:$0xf]
  %v137 = vld [vmem:[%s3 + $0x4] sm:$0xf]
  %v138 = vld [vmem:[%s3 + $0x8] sm:$0xf]
  %v139 = vld [vmem:[%s3 + $0xc] sm:$0xf]
  %v140 = vld [vmem:[%s3 + $0x10] sm:$0xf]
  %v141 = vld [vmem:[%s3 + $0x14] sm:$0xf]
  %v142 = vld [vmem:[%s3 + $0x18] sm:$0xf]
  %v143 = vld [vmem:[%s3 + $0x1c] sm:$0xf]
  %v144 = vld [vmem:[%s3 + $0x20] sm:$0xf]
  %v145 = vld [vmem:[%s3 + $0x24] sm:$0xf]
  %v146 = vld [vmem:[%s3 + $0x28] sm:$0xf]
  %v147 = vld [vmem:[%s3 + $0x2c] sm:$0xf]
  %v148 = vld [vmem:[%s3 + $0x30] sm:$0xf]
  %v149 = vld [vmem:[%s3 + $0x34] sm:$0xf]
  %v150 = vld [vmem:[%s3 + $0x38] sm:$0xf]
  %v151 = vld [vmem:[%s3 + $0x3c] sm:$0xf]
  %v152 = vld [vmem:[%s4] sm:$0x1]
  %v154 = vlaneseq
  %v155 = vshrl.u32 %v154, 7
  %v156 = vsub.s32 0, %v155
  %v157 = vrot.slane %v152, %v156
  %v175 = vunpack.c.l.b16 %v136
  %v176 = vunpack.c.l.b16 %v137
  %v177 = vunpack.c.l.b16 %v138
  %v178 = vunpack.c.l.b16 %v139
  %v179 = vunpack.c.l.b16 %v140
  %v180 = vunpack.c.l.b16 %v141
  %v181 = vunpack.c.l.b16 %v142
  %v182 = vunpack.c.l.b16 %v143
  %v183 = vunpack.c.l.b16 %v144
  %v184 = vunpack.c.l.b16 %v145
  %v185 = vunpack.c.l.b16 %v146
  %v186 = vunpack.c.l.b16 %v147
  %v187 = vunpack.c.l.b16 %v148
  %v188 = vunpack.c.l.b16 %v149
  %v189 = vunpack.c.l.b16 %v150
  %v190 = vunpack.c.l.b16 %v151
  %v191 = vpack.c.b16 %v176, %v175
  %v192 = vpack.c.b16 %v178, %v177
  %v193 = vpack.c.b16 %v180, %v179
  %v194 = vpack.c.b16 %v182, %v181
  %v195 = vpack.c.b16 %v184, %v183
  %v196 = vpack.c.b16 %v186, %v185
  %v197 = vpack.c.b16 %v188, %v187
  %v198 = vpack.c.b16 %v190, %v189
  %207 = vmatprep.subr.bf16.mxu0 0
  %208 = vmatpush1.bf16.msra.mxu0 %v191
  %209 = vmatprep.subr.bf16.mxu0 0
  %210 = vmatpush1.bf16.msra.mxu0 %v192
  %211 = vmatprep.subr.bf16.mxu0 0
  %212 = vmatpush1.bf16.msra.mxu0 %v193
  %213 = vmatprep.subr.bf16.mxu0 0
  %214 = vmatpush1.bf16.msra.mxu0 %v194
  %215 = vmatprep.subr.bf16.mxu0 0
  %216 = vmatpush1.bf16.msra.mxu0 %v195
  %217 = vmatprep.subr.bf16.mxu0 0
  %218 = vmatpush1.bf16.msra.mxu0 %v196
  %219 = vmatprep.subr.bf16.mxu0 0
  %220 = vmatpush1.bf16.msra.mxu0 %v197
  %221 = vmatprep.subr.bf16.mxu0 0
  %222 = vmatpush1.bf16.msra.mxu0 %v198
  %223 = vmatprep.subr.bf16.mxu0 0
  %224 = vmatpush1.bf16.msra.mxu0 0
  %225 = vmatprep.subr.bf16.mxu0 0
  %226 = vmatpush1.bf16.msra.mxu0 0
  %227 = vmatprep.subr.bf16.mxu0 0
  %228 = vmatpush1.bf16.msra.mxu0 0
  %229 = vmatprep.subr.bf16.mxu0 0
  %230 = vmatpush1.bf16.msra.mxu0 0
  %231 = vmatprep.subr.bf16.mxu0 0
  %232 = vmatpush1.bf16.msra.mxu0 0
  %233 = vmatprep.subr.bf16.mxu0 0
  %234 = vmatpush1.bf16.msra.mxu0 0
  %235 = vmatprep.subr.bf16.mxu0 0
  %236 = vmatpush1.bf16.msra.mxu0 0
  %237 = vmatprep.subr.bf16.mxu0 0
  %238 = vmatpush1.bf16.msra.mxu0 0
  %239 = vmatprep.mubr.bf16.mxu0 0
  %240 = vmatmul.mubr.bf16.gmra.mrb[0].mxu0 %v135
  %v241 = vpop.f32.mrb[0].mxu0
  %v242 = vadd.f32 %v157, %v241
  %v243 = vpop.f32.mrb[0].mxu0
  %v244 = vpop.f32.mrb[0].mxu0
  %v245 = vpop.f32.mrb[0].mxu0
  %246 = vdwg.mxu0
  %247 = vmax.xlane.f32.xlu0 %v242
  %v248 = vpop.xlane.xlu0 %247
  %v249 = vsub.f32 %v242, %v248
  %v250 = vmul.f32 %v249, 1.442695
  %v251 = vpow.pop %v250
  %252 = vadd.xlane.f32.xlu0 %v251
  %v253 = vpop.xlane.xlu0 %252
  %v254 = vlog2.pop %v253
  %v255 = vmul.f32 %v254, 0.6931472
  %v256 = vsub.f32 %v249, %v255
  %v257 = vpack.c.bf16 %v256, %v256
  %258 = vst [vmem:[%s5] sm:$0xf] %v257
  // Predicated region
  $region22: #{_ffnn_forward_impl.1} parent=0 // pred_check
    _
  $region23: #{_ffnn_forward_impl.1} parent=0 // pred_check_branch
    %260 = sbr.rel (0) target = $region25
  $region24: #{_ffnn_forward_impl.1} parent=0 // pred_region
    _
  $region25: #{_ffnn_forward_impl.1} parent=0 // pred_fallthru
    _
  // Predicated region
  $region26: #{_ffnn_forward_impl.1} parent=0 // pred_check
    _
  $region27: #{_ffnn_forward_impl.1} parent=0 // pred_check_branch
    %262 = sbr.rel (0) target = $region29
  $region28: #{_ffnn_forward_impl.1} parent=0 // pred_region
    _
  $region29: #{_ffnn_forward_impl.1} parent=0 // pred_fallthru
    _

// kernel: _ffnn_forward_impl.1
$region0: #{_ffnn_forward_impl.1}
  #allocation0 [shape = 'u32[]', space=smem, size = 0x4, offset = 0x4, fixed_abs, tag = 'smem constant byte address 0x4 - core index']
  #allocation1 [shape = 'u32[144,128]{1,0:T(1,128)}', space=vmem, size = 0x12000, scoped, tag = 'internal scratch']
  %s0 = inlined_call_operand.vmem [shape: f32[8,128], index: 0, kind: input, shape index: {}]
  %s1 = inlined_call_operand.vmem [shape: bf16[128,128], index: 1, kind: input, shape index: {}]
  %s2 = inlined_call_operand.vmem [shape: f32[1,128], index: 2, kind: input, shape index: {}]
  %s3 = inlined_call_operand.vmem [shape: bf16[128,128], index: 3, kind: input, shape index: {}]
  %s4 = inlined_call_operand.vmem [shape: f32[1,128], index: 4, kind: input, shape index: {}]
  %s5 = inlined_call_operand.vmem [shape: bf16[8,128], index: 5, kind: output, shape index: {}]
  %s6 = sld [smem:[#allocation0]]
  $region30: #{_ffnn_forward_impl.1} parent=0
    _
  %s8 = ssub.s32 1, %s6
  %s9 = scalar_select 0, %s8, %s6
  // Predicated region
  $region2: #{_ffnn_forward_impl.1} parent=0 // pred_check
    _
  $region3: #{_ffnn_forward_impl.1} parent=0 // pred_check_branch
    %11 = sbr.rel (0) target = $region5
  $region4: #{_ffnn_forward_impl.1} parent=0 // pred_region
    _
  $region5: #{_ffnn_forward_impl.1} parent=0 // pred_fallthru
    _
  // Predicated region
  $region6: #{_ffnn_forward_impl.1} parent=0 // pred_check
    _
  $region7: #{_ffnn_forward_impl.1} parent=0 // pred_check_branch
    %13 = sbr.rel (0) target = $region9
  $region8: #{_ffnn_forward_impl.1} parent=0 // pred_region
    _
  $region9: #{_ffnn_forward_impl.1} parent=0 // pred_fallthru
    _
  // Predicated region
  $region10: #{_ffnn_forward_impl.1} parent=0 // pred_check
    _
  $region11: #{_ffnn_forward_impl.1} parent=0 // pred_check_branch
    %15 = sbr.rel (0) target = $region13
  $region12: #{_ffnn_forward_impl.1} parent=0 // pred_region
    _
  $region13: #{_ffnn_forward_impl.1} parent=0 // pred_fallthru
    _
  // Predicated region
  $region14: #{_ffnn_forward_impl.1} parent=0 // pred_check
    _
  $region15: #{_ffnn_forward_impl.1} parent=0 // pred_check_branch
    %17 = sbr.rel (0) target = $region17
  $region16: #{_ffnn_forward_impl.1} parent=0 // pred_region
    _
  $region17: #{_ffnn_forward_impl.1} parent=0 // pred_fallthru
    _
  // Predicated region
  $region18: #{_ffnn_forward_impl.1} parent=0 // pred_check
    _
  $region19: #{_ffnn_forward_impl.1} parent=0 // pred_check_branch
    %19 = sbr.rel (0) target = $region21
  $region20: #{_ffnn_forward_impl.1} parent=0 // pred_region
    _
  $region21: #{_ffnn_forward_impl.1} parent=0 // pred_fallthru
    _
  %v21 = vld [vmem:[%s0] sm:$0xff]
  %v22 = vpack.c.bf16 %v21, %v21
  %v23 = vld [vmem:[%s1] sm:$0xf]
  %v24 = vld [vmem:[%s1 + $0x4] sm:$0xf]
  %v25 = vld [vmem:[%s1 + $0x8] sm:$0xf]
  %v26 = vld [vmem:[%s1 + $0xc] sm:$0xf]
  %v27 = vld [vmem:[%s1 + $0x10] sm:$0xf]
  %v28 = vld [vmem:[%s1 + $0x14] sm:$0xf]
  %v29 = vld [vmem:[%s1 + $0x18] sm:$0xf]
  %v30 = vld [vmem:[%s1 + $0x1c] sm:$0xf]
  %v31 = vld [vmem:[%s1 + $0x20] sm:$0xf]
  %v32 = vld [vmem:[%s1 + $0x24] sm:$0xf]
  %v33 = vld [vmem:[%s1 + $0x28] sm:$0xf]
  %v34 = vld [vmem:[%s1 + $0x2c] sm:$0xf]
  %v35 = vld [vmem:[%s1 + $0x30] sm:$0xf]
  %v36 = vld [vmem:[%s1 + $0x34] sm:$0xf]
  %v37 = vld [vmem:[%s1 + $0x38] sm:$0xf]
  %v38 = vld [vmem:[%s1 + $0x3c] sm:$0xf]
  %v39 = vld [vmem:[%s2] sm:$0x1]
  %v41 = vlaneseq
  %v42 = vshrl.u32 %v41, 7
  %v43 = vsub.s32 0, %v42
  %v44 = vrot.slane %v39, %v43
  %v62 = vunpack.c.l.b16 %v23
  %v63 = vunpack.c.l.b16 %v24
  %v64 = vunpack.c.l.b16 %v25
  %v65 = vunpack.c.l.b16 %v26
  %v66 = vunpack.c.l.b16 %v27
  %v67 = vunpack.c.l.b16 %v28
  %v68 = vunpack.c.l.b16 %v29
  %v69 = vunpack.c.l.b16 %v30
  %v70 = vunpack.c.l.b16 %v31
  %v71 = vunpack.c.l.b16 %v32
  %v72 = vunpack.c.l.b16 %v33
  %v73 = vunpack.c.l.b16 %v34
  %v74 = vunpack.c.l.b16 %v35
  %v75 = vunpack.c.l.b16 %v36
  %v76 = vunpack.c.l.b16 %v37
  %v77 = vunpack.c.l.b16 %v38
  %v78 = vpack.c.b16 %v63, %v62
  %v79 = vpack.c.b16 %v65, %v64
  %v80 = vpack.c.b16 %v67, %v66
  %v81 = vpack.c.b16 %v69, %v68
  %v82 = vpack.c.b16 %v71, %v70
  %v83 = vpack.c.b16 %v73, %v72
  %v84 = vpack.c.b16 %v75, %v74
  %v85 = vpack.c.b16 %v77, %v76
  %94 = vmatprep.subr.bf16.mxu0 0
  %95 = vmatpush1.bf16.msra.mxu0 %v78
  %96 = vmatprep.subr.bf16.mxu0 0
  %97 = vmatpush1.bf16.msra.mxu0 %v79
  %98 = vmatprep.subr.bf16.mxu0 0
  %99 = vmatpush1.bf16.msra.mxu0 %v80
  %100 = vmatprep.subr.bf16.mxu0 0
  %101 = vmatpush1.bf16.msra.mxu0 %v81
  %102 = vmatprep.subr.bf16.mxu0 0
  %103 = vmatpush1.bf16.msra.mxu0 %v82
  %104 = vmatprep.subr.bf16.mxu0 0
  %105 = vmatpush1.bf16.msra.mxu0 %v83
  %106 = vmatprep.subr.bf16.mxu0 0
  %107 = vmatpush1.bf16.msra.mxu0 %v84
  %108 = vmatprep.subr.bf16.mxu0 0
  %109 = vmatpush1.bf16.msra.mxu0 %v85
  %110 = vmatprep.subr.bf16.mxu0 0
  %111 = vmatpush1.bf16.msra.mxu0 0
  %112 = vmatprep.subr.bf16.mxu0 0
  %113 = vmatpush1.bf16.msra.mxu0 0
  %114 = vmatprep.subr.bf16.mxu0 0
  %115 = vmatpush1.bf16.msra.mxu0 0
  %116 = vmatprep.subr.bf16.mxu0 0
  %117 = vmatpush1.bf16.msra.mxu0 0
  %118 = vmatprep.subr.bf16.mxu0 0
  %119 = vmatpush1.bf16.msra.mxu0 0
  %120 = vmatprep.subr.bf16.mxu0 0
  %121 = vmatpush1.bf16.msra.mxu0 0
  %122 = vmatprep.subr.bf16.mxu0 0
  %123 = vmatpush1.bf16.msra.mxu0 0
  %124 = vmatprep.subr.bf16.mxu0 0
  %125 = vmatpush1.bf16.msra.mxu0 0
  %126 = vmatprep.mubr.bf16.mxu0 0
  %127 = vmatmul.mubr.bf16.gmra.mrb[0].mxu0 %v22
  %v128 = vpop.f32.mrb[0].mxu0
  %v129 = vadd.f32 %v44, %v128
  %v130 = vpop.f32.mrb[0].mxu0
  %v131 = vpop.f32.mrb[0].mxu0
  %v132 = vpop.f32.mrb[0].mxu0
  %133 = vdwg.mxu0
  %v134 = vmax.f32 %v129, 0.0
  %v135 = vpack.c.bf16 %v134, %v134
  %v136 = vld [vmem:[%s3] sm:$0xf]
  %v137 = vld [vmem:[%s3 + $0x4] sm:$0xf]
  %v138 = vld [vmem:[%s3 + $0x8] sm:$0xf]
  %v139 = vld [vmem:[%s3 + $0xc] sm:$0xf]
  %v140 = vld [vmem:[%s3 + $0x10] sm:$0xf]
  %v141 = vld [vmem:[%s3 + $0x14] sm:$0xf]
  %v142 = vld [vmem:[%s3 + $0x18] sm:$0xf]
  %v143 = vld [vmem:[%s3 + $0x1c] sm:$0xf]
  %v144 = vld [vmem:[%s3 + $0x20] sm:$0xf]
  %v145 = vld [vmem:[%s3 + $0x24] sm:$0xf]
  %v146 = vld [vmem:[%s3 + $0x28] sm:$0xf]
  %v147 = vld [vmem:[%s3 + $0x2c] sm:$0xf]
  %v148 = vld [vmem:[%s3 + $0x30] sm:$0xf]
  %v149 = vld [vmem:[%s3 + $0x34] sm:$0xf]
  %v150 = vld [vmem:[%s3 + $0x38] sm:$0xf]
  %v151 = vld [vmem:[%s3 + $0x3c] sm:$0xf]
  %v152 = vld [vmem:[%s4] sm:$0x1]
  %v154 = vlaneseq
  %v155 = vshrl.u32 %v154, 7
  %v156 = vsub.s32 0, %v155
  %v157 = vrot.slane %v152, %v156
  %v175 = vunpack.c.l.b16 %v136
  %v176 = vunpack.c.l.b16 %v137
  %v177 = vunpack.c.l.b16 %v138
  %v178 = vunpack.c.l.b16 %v139
  %v179 = vunpack.c.l.b16 %v140
  %v180 = vunpack.c.l.b16 %v141
  %v181 = vunpack.c.l.b16 %v142
  %v182 = vunpack.c.l.b16 %v143
  %v183 = vunpack.c.l.b16 %v144
  %v184 = vunpack.c.l.b16 %v145
  %v185 = vunpack.c.l.b16 %v146
  %v186 = vunpack.c.l.b16 %v147
  %v187 = vunpack.c.l.b16 %v148
  %v188 = vunpack.c.l.b16 %v149
  %v189 = vunpack.c.l.b16 %v150
  %v190 = vunpack.c.l.b16 %v151
  %v191 = vpack.c.b16 %v176, %v175
  %v192 = vpack.c.b16 %v178, %v177
  %v193 = vpack.c.b16 %v180, %v179
  %v194 = vpack.c.b16 %v182, %v181
  %v195 = vpack.c.b16 %v184, %v183
  %v196 = vpack.c.b16 %v186, %v185
  %v197 = vpack.c.b16 %v188, %v187
  %v198 = vpack.c.b16 %v190, %v189
  %207 = vmatprep.subr.bf16.mxu0 0
  %208 = vmatpush1.bf16.msra.mxu0 %v191
  %209 = vmatprep.subr.bf16.mxu0 0
  %210 = vmatpush1.bf16.msra.mxu0 %v192
  %211 = vmatprep.subr.bf16.mxu0 0
  %212 = vmatpush1.bf16.msra.mxu0 %v193
  %213 = vmatprep.subr.bf16.mxu0 0
  %214 = vmatpush1.bf16.msra.mxu0 %v194
  %215 = vmatprep.subr.bf16.mxu0 0
  %216 = vmatpush1.bf16.msra.mxu0 %v195
  %217 = vmatprep.subr.bf16.mxu0 0
  %218 = vmatpush1.bf16.msra.mxu0 %v196
  %219 = vmatprep.subr.bf16.mxu0 0
  %220 = vmatpush1.bf16.msra.mxu0 %v197
  %221 = vmatprep.subr.bf16.mxu0 0
  %222 = vmatpush1.bf16.msra.mxu0 %v198
  %223 = vmatprep.subr.bf16.mxu0 0
  %224 = vmatpush1.bf16.msra.mxu0 0
  %225 = vmatprep.subr.bf16.mxu0 0
  %226 = vmatpush1.bf16.msra.mxu0 0
  %227 = vmatprep.subr.bf16.mxu0 0
  %228 = vmatpush1.bf16.msra.mxu0 0
  %229 = vmatprep.subr.bf16.mxu0 0
  %230 = vmatpush1.bf16.msra.mxu0 0
  %231 = vmatprep.subr.bf16.mxu0 0
  %232 = vmatpush1.bf16.msra.mxu0 0
  %233 = vmatprep.subr.bf16.mxu0 0
  %234 = vmatpush1.bf16.msra.mxu0 0
  %235 = vmatprep.subr.bf16.mxu0 0
  %236 = vmatpush1.bf16.msra.mxu0 0
  %237 = vmatprep.subr.bf16.mxu0 0
  %238 = vmatpush1.bf16.msra.mxu0 0
  %239 = vmatprep.mubr.bf16.mxu0 0
  %240 = vmatmul.mubr.bf16.gmra.mrb[0].mxu0 %v135
  %v241 = vpop.f32.mrb[0].mxu0
  %v242 = vadd.f32 %v157, %v241
  %v243 = vpop.f32.mrb[0].mxu0
  %v244 = vpop.f32.mrb[0].mxu0
  %v245 = vpop.f32.mrb[0].mxu0
  %246 = vdwg.mxu0
  %247 = vmax.xlane.f32.xlu0 %v242
  %v248 = vpop.xlane.xlu0 %247
  %v249 = vsub.f32 %v242, %v248
  %v250 = vmul.f32 %v249, 1.442695
  %v251 = vpow.pop %v250
  %252 = vadd.xlane.f32.xlu0 %v251
  %v253 = vpop.xlane.xlu0 %252
  %v254 = vlog2.pop %v253
  %v255 = vmul.f32 %v254, 0.6931472
  %v256 = vsub.f32 %v249, %v255
  %v257 = vpack.c.bf16 %v256, %v256
  %258 = vst [vmem:[%s5] sm:$0xf] %v257
  // Predicated region
  $region22: #{_ffnn_forward_impl.1} parent=0 // pred_check
    _
  $region23: #{_ffnn_forward_impl.1} parent=0 // pred_check_branch
    %260 = sbr.rel (0) target = $region25
  $region24: #{_ffnn_forward_impl.1} parent=0 // pred_region
    _
  $region25: #{_ffnn_forward_impl.1} parent=0 // pred_fallthru
    _
  // Predicated region
  $region26: #{_ffnn_forward_impl.1} parent=0 // pred_check
    _
  $region27: #{_ffnn_forward_impl.1} parent=0 // pred_check_branch
    %262 = sbr.rel (0) target = $region29
  $region28: #{_ffnn_forward_impl.1} parent=0 // pred_region
    _
  $region29: #{_ffnn_forward_impl.1} parent=0 // pred_fallthru
    _

</llo_original>
